<compile_context>
chip_gen: v6e
topology: v6e:2x2x1
jax: 0.10.0
libtpu: 0.0.40
codegen_flags: <defaults>
</compile_context>

<pallas_src>
import numpy as np
import jax
import jax.numpy as jnp
from jax.experimental import pallas as pl
from jax.experimental.pallas import tpu as pltpu


# ----------------------------- static slab layout ---------------------------
# All row offsets are multiples of 8; all matrices start at column 0.
_A1_R = 0     # folded conv1+pool1 matrix      (16, 81)   rows 0..15
_BM1_R = 16   # b1 * valid-tap mask            (1, 81)    row 16
_BM2_R = 24   # b2 * valid-tap mask            (1, 36)    row 24
_A2_R = 32    # folded conv2+pool2 matrix      (9, 36)    rows 32..40
_W1_R = 48    # linear1                        (4, 16)    rows 48..51
_W2_R = 56    # linear2                        (16, 16)   rows 56..71
_W3_R = 72    # linear3                        (16, 1)    rows 72..87
_C1_R = 88    # linear1 bias                   (1, 16)
_C2_R = 96    # linear2 bias                   (1, 16)
_C3_R = 104   # linear3 bias                   (1, 1)
_SLAB_SHAPE = (128, 128)


# ----------------------------- setup helpers (plain numpy) ------------------

def conv_as_matrix(w, H, W, pad=1):
    """Dense M such that flat(conv2d(x, w, pad)) == flat(x) @ M."""
    k = w.shape[0]
    Ho, Wo = H + 2 * pad - k + 1, W + 2 * pad - k + 1
    M = np.zeros((H * W, Ho * Wo), np.float32)
    for ho in range(Ho):
        for wo in range(Wo):
            for ki in range(k):
                for kj in range(k):
                    hi, wi = ho + ki - pad, wo + kj - pad
                    if 0 <= hi < H and 0 <= wi < W:
                        M[hi * W + wi, ho * Wo + wo] += float(w[ki, kj])
    return M


def pool_tap_selectors_cat(H, W, k=3, pad=1, stride=2):
    """(HW_in, k*k*HW_out) 0/1 selectors, taps concatenated tap-major along
    the output axis.  Tap t occupies columns [t*HW_out, (t+1)*HW_out)."""
    Ho = (H + 2 * pad - k) // stride + 1
    Wo = (W + 2 * pad - k) // stride + 1
    S = np.zeros((k * k, H * W, Ho * Wo), np.float32)
    for ho in range(Ho):
        for wo in range(Wo):
            for ki in range(k):
                for kj in range(k):
                    hi, wi = ho * stride + ki - pad, wo * stride + kj - pad
                    if 0 <= hi < H and 0 <= wi < W:
                        S[ki * k + kj, hi * W + wi, ho * Wo + wo] = 1.0
    return np.concatenate([S[t] for t in range(k * k)], axis=1)


def fold_conv_pool(w, b, H, W):
    """Fold conv2d(k=2,pad=1) and the 9 maxpool taps into one matrix.

    Returns (A, bmask):
      A     = M_conv @ S_pool           (H*W, 9*HWp)  -- exact column gather
      bmask = b * valid_tap_mask        (1,   9*HWp)
    so that relu(x @ A + bmask) holds, tap-major, the post-ReLU conv value at
    every (tap, pooled-position) pair (0 for out-of-image taps).  Max over the
    9 tap groups then reproduces MaxPool2d(3, pad=1, stride=2) exactly because
    pool inputs are post-ReLU (>= 0) and every window has a valid element.
    """
    M = conv_as_matrix(w, H, W, pad=1)            # (H*W, Hc*Wc)
    Hc, Wc = H + 1, W + 1                         # conv k=2, pad=1, stride=1
    S = pool_tap_selectors_cat(Hc, Wc)            # (Hc*Wc, 9*HWp)
    A = (M @ S).astype(np.float32)                # one-hot columns -> exact
    valid = (S.sum(axis=0) > 0).astype(np.float32)
    return A, (float(b) * valid)[None, :].astype(np.float32)


def build_slab(raw):
    slab = np.zeros(_SLAB_SHAPE, np.float32)

    def put(r, mat):
        mat = np.asarray(mat, np.float32)
        slab[r:r + mat.shape[0], 0:mat.shape[1]] = mat

    A1, bm1 = fold_conv_pool(raw["w1c"], raw["b1c"], 4, 4)   # (16,81), (1,81)
    A2, bm2 = fold_conv_pool(raw["w2c"], raw["b2c"], 3, 3)   # (9,36),  (1,36)
    put(_A1_R, A1)
    put(_BM1_R, bm1)
    put(_A2_R, A2)
    put(_BM2_R, bm2)
    put(_W1_R, raw["W1"])                                    # (4, 16)
    put(_W2_R, raw["W2"])                                    # (16, 16)
    put(_W3_R, raw["W3"])                                    # (16, 1)
    put(_C1_R, np.asarray(raw["c1"], np.float32)[None, :])   # (1, 16)
    put(_C2_R, np.asarray(raw["c2"], np.float32)[None, :])   # (1, 16)
    put(_C3_R, np.asarray(raw["c3"], np.float32).reshape(1, 1))
    return jnp.asarray(slab)


# ----------------------------- Pallas kernel --------------------------------

def cnn0_kernel(x_ref, w_ref, out_ref):
    f32 = jnp.float32
    x = x_ref[...]                                        # (B, 16)

    # Static, 8/128-aligned ref slices (no full-slab materialization).
    A1 = w_ref[_A1_R:_A1_R + 16, 0:81]
    bm1 = w_ref[_BM1_R:_BM1_R + 1, 0:81]
    A2 = w_ref[_A2_R:_A2_R + 9, 0:36]
    bm2 = w_ref[_BM2_R:_BM2_R + 1, 0:36]
    W1 = w_ref[_W1_R:_W1_R + 4, 0:16]
    W2 = w_ref[_W2_R:_W2_R + 16, 0:16]
    W3 = w_ref[_W3_R:_W3_R + 16, 0:1]
    c1 = w_ref[_C1_R:_C1_R + 1, 0:16]
    c2 = w_ref[_C2_R:_C2_R + 1, 0:16]
    c3 = w_ref[_C3_R:_C3_R + 1, 0:1]

    # --- stage 1: conv1 + bias + ReLU + pool tap-gather as ONE matmul ------
    t1 = jnp.maximum(jnp.dot(x, A1, preferred_element_type=f32) + bm1, 0.0)  # (B,81)
    # Tap-max over the 9 tap groups (group width 9, tap-major), as a 4-step
    # log-tree: every intermediate column stays a max over same-position taps,
    # and the final 9 columns cover all 9 taps exactly.
    r = jnp.maximum(t1[:, 0:45], t1[:, 36:81])            # taps {t, t+4}
    r = jnp.maximum(r[:, 0:27], r[:, 18:45])
    r = jnp.maximum(r[:, 0:18], r[:, 9:27])
    p1 = jnp.maximum(r[:, 0:9], r[:, 9:18])               # (B, 9) pooled 3x3

    # --- stage 2: conv2 + bias + ReLU + pool tap-gather as ONE matmul ------
    t2 = jnp.maximum(jnp.dot(p1, A2, preferred_element_type=f32) + bm2, 0.0)  # (B,36)
    s = jnp.maximum(t2[:, 0:20], t2[:, 16:36])            # group width 4
    s = jnp.maximum(s[:, 0:12], s[:, 8:20])
    s = jnp.maximum(s[:, 0:8], s[:, 4:12])
    p2 = jnp.maximum(s[:, 0:4], s[:, 4:8])                # (B, 4) pooled 2x2

    # --- flatten is a no-op; MLP 4 -> 16 -> 16 -> 1 + sigmoid ---------------
    h = jnp.maximum(jnp.dot(p2, W1, preferred_element_type=f32) + c1, 0.0)
    h = jnp.maximum(jnp.dot(h, W2, preferred_element_type=f32) + c2, 0.0)
    z = jnp.dot(h, W3, preferred_element_type=f32) + c3
    out_ref[...] = jax.nn.sigmoid(z).astype(out_ref.dtype)


def _pick_batch_block(N, batch_block):
    """Big blocks to amortize ~0.35us/step overhead, but >= 2 blocks for large
    N so both v7x TensorCores get work under dimension_semantics=parallel."""
    if N <= 256:
        return N                      # single block; block == full dim is legal
    b = min(batch_block, -(-N // 2))  # at least 2 blocks
    return max(8, (b // 8) * 8)


def cnn0_forward(x_nchw, slab, *, batch_block=2048):
    N = x_nchw.shape[0]
    x_flat = x_nchw.reshape(N, -1).astype(jnp.float32)    # (N, 16)

    B = _pick_batch_block(N, batch_block)
    G = -(-N // B)
    Np = G * B
    if Np != N:                                           # pad so blocks divide
        x_flat = jnp.pad(x_flat, ((0, Np - N), (0, 0)))

    out = pl.pallas_call(
        cnn0_kernel,
        out_shape=jax.ShapeDtypeStruct((Np, 1), jnp.float32),
        grid_spec=pltpu.PrefetchScalarGridSpec(
            num_scalar_prefetch=0,
            grid=(G,),
            in_specs=[pl.BlockSpec((B, 16), lambda i: (i, 0)),
                      pl.BlockSpec(_SLAB_SHAPE, lambda i: (0, 0))],
            out_specs=pl.BlockSpec((B, 1), lambda i: (i, 0)),
        ),
        compiler_params=pltpu.CompilerParams(
            dimension_semantics=("parallel",)),
    )(x_flat, slab)
    return out[:N] if Np != N else out


# ----------------------------- deterministic params -------------------------

def init_params(key):
    ks = jax.random.split(key, 10)
    w1c = jax.random.normal(ks[0], (2, 2), jnp.float32) * 0.5
    b1c = jax.random.normal(ks[1], (), jnp.float32) * 0.1
    w2c = jax.random.normal(ks[2], (2, 2), jnp.float32) * 0.5
    b2c = jax.random.normal(ks[3], (), jnp.float32) * 0.1
    W1 = jax.random.normal(ks[4], (4, 16), jnp.float32) * 0.5
    c1 = jax.random.normal(ks[5], (16,), jnp.float32) * 0.1
    W2 = jax.random.normal(ks[6], (16, 16), jnp.float32) * 0.25
    c2 = jax.random.normal(ks[7], (16,), jnp.float32) * 0.1
    W3 = jax.random.normal(ks[8], (16, 1), jnp.float32) * 0.25
    c3 = jax.random.normal(ks[9], (1,), jnp.float32) * 0.1

    raw = dict(w1c=np.asarray(w1c), b1c=float(b1c),
               w2c=np.asarray(w2c), b2c=float(b2c),
               W1=np.asarray(W1), c1=np.asarray(c1),
               W2=np.asarray(W2), c2=np.asarray(c2),
               W3=np.asarray(W3), c3=np.asarray(c3))
    return build_slab(raw), raw


# ----------------------------- numpy reference (for validation) -------------

def np_conv2d(x, w, b, pad=1):
    N, H, W = x.shape
    k = w.shape[0]
    Ho, Wo = H + 2 * pad - k + 1, W + 2 * pad - k + 1
    xp = np.zeros((N, H + 2 * pad, W + 2 * pad), np.float32)
    xp[:, pad:pad + H, pad:pad + W] = x
    out = np.full((N, Ho, Wo), b, np.float32)
    for ki in range(k):
        for kj in range(k):
            out += w[ki, kj] * xp[:, ki:ki + Ho, kj:kj + Wo]
    return out


def np_maxpool(x, k=3, pad=1, stride=2):
    N, H, W = x.shape
    Ho = (H + 2 * pad - k) // stride + 1
    Wo = (W + 2 * pad - k) // stride + 1
    xp = np.full((N, H + 2 * pad, W + 2 * pad), -np.inf, np.float32)
    xp[:, pad:pad + H, pad:pad + W] = x
    out = np.empty((N, Ho, Wo), np.float32)
    for i in range(Ho):
        for j in range(Wo):
            out[:, i, j] = xp[:, i * stride:i * stride + k,
                              j * stride:j * stride + k].max(axis=(1, 2))
    return out


def np_reference(x_nchw, raw):
    x = x_nchw[:, 0].astype(np.float32)
    a = np.maximum(np_conv2d(x, raw["w1c"], raw["b1c"]), 0.0)
    p = np_maxpool(a)
    a2 = np.maximum(np_conv2d(p, raw["w2c"], raw["b2c"]), 0.0)
    p2 = np_maxpool(a2)
    f = p2.reshape(x.shape[0], -1)
    h = np.maximum(f @ raw["W1"] + raw["c1"], 0.0)
    h = np.maximum(h @ raw["W2"] + raw["c2"], 0.0)
    z = h @ raw["W3"] + raw["c3"]
    return 1.0 / (1.0 + np.exp(-z))


# ----------------------------- main ------------------------------------------

if __name__ == "__main__":
    key = jax.random.PRNGKey(0)
    pkey, xkey = jax.random.split(key)
    slab, raw = init_params(pkey)

    # Input size implied by Linear(1*2*2, 16): 4x4 spatial, 1 channel.
    x = jax.random.normal(xkey, (2, 1, 4, 4), jnp.float32)
    out = jax.block_until_ready(cnn0_forward(x, slab))
    assert out.shape == (2, 1), out.shape
    ref = np_reference(np.asarray(x), raw)
    np.testing.assert_allclose(np.asarray(out), ref, rtol=1e-5, atol=1e-5)

    # Exercise the multi-block / padded-batch path (3 blocks of 144 rows).
    xb = jax.random.normal(jax.random.PRNGKey(1), (300, 1, 4, 4), jnp.float32)
    outb = jax.block_until_ready(cnn0_forward(xb, slab))
    refb = np_reference(np.asarray(xb), raw)
    np.testing.assert_allclose(np.asarray(outb), refb, rtol=1e-5, atol=1e-5)

    print("KERNEL_OK")
</pallas_src>

<mosaic_0001>
module attributes {stable_mosaic.version = 11 : i64} {
  func.func @cnn0_kernel(%arg0: i32, %arg1: memref<2x16xf32, #tpu.memory_space<vmem>>, %arg2: memref<128x128xf32, #tpu.memory_space<vmem>>, %arg3: memref<2x1xf32, #tpu.memory_space<vmem>>) attributes {dimension_semantics = [#tpu.dimension_semantics<parallel>], iteration_bounds = array<i64: 1>, scalar_prefetch = 0 : i64, scratch_operands = 0 : i64, tpu.core_type = #tpu.core_type<tc>, window_params = [{transform_indices = @transform_0, window_bounds = array<i64: 2, 16>}, {pipeline_mode = #tpu.pipeline_mode<synchronous>, transform_indices = @transform_1, window_bounds = array<i64: 128, 128>}, {transform_indices = @transform_2, window_bounds = array<i64: 2, 1>}]} {
    %c0 = arith.constant 0 : index
    %c0_0 = arith.constant 0 : index
    %0 = vector.load %arg1[%c0, %c0_0] : memref<2x16xf32, #tpu.memory_space<vmem>>, vector<2x16xf32>
    %c0_1 = arith.constant 0 : index
    %c0_2 = arith.constant 0 : index
    %1 = vector.load %arg2[%c0_1, %c0_2] : memref<128x128xf32, #tpu.memory_space<vmem>>, vector<16x81xf32>
    %c16 = arith.constant 16 : index
    %c0_3 = arith.constant 0 : index
    %2 = vector.load %arg2[%c16, %c0_3] : memref<128x128xf32, #tpu.memory_space<vmem>>, vector<1x81xf32>
    %c32 = arith.constant 32 : index
    %c0_4 = arith.constant 0 : index
    %3 = vector.load %arg2[%c32, %c0_4] : memref<128x128xf32, #tpu.memory_space<vmem>>, vector<9x36xf32>
    %c24 = arith.constant 24 : index
    %c0_5 = arith.constant 0 : index
    %4 = vector.load %arg2[%c24, %c0_5] : memref<128x128xf32, #tpu.memory_space<vmem>>, vector<1x36xf32>
    %c48 = arith.constant 48 : index
    %c0_6 = arith.constant 0 : index
    %5 = vector.load %arg2[%c48, %c0_6] : memref<128x128xf32, #tpu.memory_space<vmem>>, vector<4x16xf32>
    %c56 = arith.constant 56 : index
    %c0_7 = arith.constant 0 : index
    %6 = vector.load %arg2[%c56, %c0_7] : memref<128x128xf32, #tpu.memory_space<vmem>>, vector<16x16xf32>
    %c72 = arith.constant 72 : index
    %c0_8 = arith.constant 0 : index
    %7 = vector.load %arg2[%c72, %c0_8] : memref<128x128xf32, #tpu.memory_space<vmem>>, vector<16x1xf32>
    %c88 = arith.constant 88 : index
    %c0_9 = arith.constant 0 : index
    %8 = vector.load %arg2[%c88, %c0_9] : memref<128x128xf32, #tpu.memory_space<vmem>>, vector<1x16xf32>
    %c96 = arith.constant 96 : index
    %c0_10 = arith.constant 0 : index
    %9 = vector.load %arg2[%c96, %c0_10] : memref<128x128xf32, #tpu.memory_space<vmem>>, vector<1x16xf32>
    %c104 = arith.constant 104 : index
    %c0_11 = arith.constant 0 : index
    %10 = vector.load %arg2[%c104, %c0_11] : memref<128x128xf32, #tpu.memory_space<vmem>>, vector<1x1xf32>
    %cst = arith.constant dense<0.000000e+00> : vector<2x81xf32>
    %11 = tpu.matmul %0, %1, %cst {dimension_numbers = #tpu.dot_dimension_numbers<[1], [0], [0], [1], [0, 0, 1, 1], [], []>} : vector<2x16xf32>, vector<16x81xf32>, vector<2x81xf32> -> vector<2x81xf32>
    %12 = vector.broadcast %2 : vector<1x81xf32> to vector<2x81xf32>
    %13 = arith.addf %11, %12 : vector<2x81xf32>
    %cst_12 = arith.constant 0.000000e+00 : f32
    %14 = vector.broadcast %cst_12 : f32 to vector<2x81xf32>
    %15 = arith.maximumf %13, %14 : vector<2x81xf32>
    %16 = vector.extract_strided_slice %15 {offsets = [0, 0], sizes = [2, 45], strides = [1, 1]} : vector<2x81xf32> to vector<2x45xf32>
    %17 = vector.extract_strided_slice %15 {offsets = [0, 36], sizes = [2, 45], strides = [1, 1]} : vector<2x81xf32> to vector<2x45xf32>
    %18 = arith.maximumf %16, %17 : vector<2x45xf32>
    %19 = vector.extract_strided_slice %18 {offsets = [0, 0], sizes = [2, 27], strides = [1, 1]} : vector<2x45xf32> to vector<2x27xf32>
    %20 = vector.extract_strided_slice %18 {offsets = [0, 18], sizes = [2, 27], strides = [1, 1]} : vector<2x45xf32> to vector<2x27xf32>
    %21 = arith.maximumf %19, %20 : vector<2x27xf32>
    %22 = vector.extract_strided_slice %21 {offsets = [0, 0], sizes = [2, 18], strides = [1, 1]} : vector<2x27xf32> to vector<2x18xf32>
    %23 = vector.extract_strided_slice %21 {offsets = [0, 9], sizes = [2, 18], strides = [1, 1]} : vector<2x27xf32> to vector<2x18xf32>
    %24 = arith.maximumf %22, %23 : vector<2x18xf32>
    %25 = vector.extract_strided_slice %24 {offsets = [0, 0], sizes = [2, 9], strides = [1, 1]} : vector<2x18xf32> to vector<2x9xf32>
    %26 = vector.extract_strided_slice %24 {offsets = [0, 9], sizes = [2, 9], strides = [1, 1]} : vector<2x18xf32> to vector<2x9xf32>
    %27 = arith.maximumf %25, %26 : vector<2x9xf32>
    %cst_13 = arith.constant dense<0.000000e+00> : vector<2x36xf32>
    %28 = tpu.matmul %27, %3, %cst_13 {dimension_numbers = #tpu.dot_dimension_numbers<[1], [0], [0], [1], [0, 0, 1, 1], [], []>} : vector<2x9xf32>, vector<9x36xf32>, vector<2x36xf32> -> vector<2x36xf32>
    %29 = vector.broadcast %4 : vector<1x36xf32> to vector<2x36xf32>
    %30 = arith.addf %28, %29 : vector<2x36xf32>
    %cst_14 = arith.constant 0.000000e+00 : f32
    %31 = vector.broadcast %cst_14 : f32 to vector<2x36xf32>
    %32 = arith.maximumf %30, %31 : vector<2x36xf32>
    %33 = vector.extract_strided_slice %32 {offsets = [0, 0], sizes = [2, 20], strides = [1, 1]} : vector<2x36xf32> to vector<2x20xf32>
    %34 = vector.extract_strided_slice %32 {offsets = [0, 16], sizes = [2, 20], strides = [1, 1]} : vector<2x36xf32> to vector<2x20xf32>
    %35 = arith.maximumf %33, %34 : vector<2x20xf32>
    %36 = vector.extract_strided_slice %35 {offsets = [0, 0], sizes = [2, 12], strides = [1, 1]} : vector<2x20xf32> to vector<2x12xf32>
    %37 = vector.extract_strided_slice %35 {offsets = [0, 8], sizes = [2, 12], strides = [1, 1]} : vector<2x20xf32> to vector<2x12xf32>
    %38 = arith.maximumf %36, %37 : vector<2x12xf32>
    %39 = vector.extract_strided_slice %38 {offsets = [0, 0], sizes = [2, 8], strides = [1, 1]} : vector<2x12xf32> to vector<2x8xf32>
    %40 = vector.extract_strided_slice %38 {offsets = [0, 4], sizes = [2, 8], strides = [1, 1]} : vector<2x12xf32> to vector<2x8xf32>
    %41 = arith.maximumf %39, %40 : vector<2x8xf32>
    %42 = vector.extract_strided_slice %41 {offsets = [0, 0], sizes = [2, 4], strides = [1, 1]} : vector<2x8xf32> to vector<2x4xf32>
    %43 = vector.extract_strided_slice %41 {offsets = [0, 4], sizes = [2, 4], strides = [1, 1]} : vector<2x8xf32> to vector<2x4xf32>
    %44 = arith.maximumf %42, %43 : vector<2x4xf32>
    %cst_15 = arith.constant dense<0.000000e+00> : vector<2x16xf32>
    %45 = tpu.matmul %44, %5, %cst_15 {dimension_numbers = #tpu.dot_dimension_numbers<[1], [0], [0], [1], [0, 0, 1, 1], [], []>} : vector<2x4xf32>, vector<4x16xf32>, vector<2x16xf32> -> vector<2x16xf32>
    %46 = vector.broadcast %8 : vector<1x16xf32> to vector<2x16xf32>
    %47 = arith.addf %45, %46 : vector<2x16xf32>
    %cst_16 = arith.constant 0.000000e+00 : f32
    %48 = vector.broadcast %cst_16 : f32 to vector<2x16xf32>
    %49 = arith.maximumf %47, %48 : vector<2x16xf32>
    %cst_17 = arith.constant dense<0.000000e+00> : vector<2x16xf32>
    %50 = tpu.matmul %49, %6, %cst_17 {dimension_numbers = #tpu.dot_dimension_numbers<[1], [0], [0], [1], [0, 0, 1, 1], [], []>} : vector<2x16xf32>, vector<16x16xf32>, vector<2x16xf32> -> vector<2x16xf32>
    %51 = vector.broadcast %9 : vector<1x16xf32> to vector<2x16xf32>
    %52 = arith.addf %50, %51 : vector<2x16xf32>
    %cst_18 = arith.constant 0.000000e+00 : f32
    %53 = vector.broadcast %cst_18 : f32 to vector<2x16xf32>
    %54 = arith.maximumf %52, %53 : vector<2x16xf32>
    %cst_19 = arith.constant dense<0.000000e+00> : vector<2x1xf32>
    %55 = tpu.matmul %54, %7, %cst_19 {dimension_numbers = #tpu.dot_dimension_numbers<[1], [0], [0], [1], [0, 0, 1, 1], [], []>} : vector<2x16xf32>, vector<16x1xf32>, vector<2x1xf32> -> vector<2x1xf32>
    %56 = vector.broadcast %10 : vector<1x1xf32> to vector<2x1xf32>
    %57 = arith.addf %55, %56 : vector<2x1xf32>
    %58 = arith.negf %57 : vector<2x1xf32>
    %59 = math.exp %58 : vector<2x1xf32>
    %cst_20 = arith.constant 1.000000e+00 : f32
    %60 = vector.broadcast %cst_20 : f32 to vector<2x1xf32>
    %61 = arith.addf %60, %59 : vector<2x1xf32>
    %62 = arith.divf %60, %61 : vector<2x1xf32>
    %c0_21 = arith.constant 0 : index
    %c0_22 = arith.constant 0 : index
    %63 = vector.load %arg3[%c0_21, %c0_22] : memref<2x1xf32, #tpu.memory_space<vmem>>, vector<2x1xf32>
    tpu.vector_store %arg3[%c0_21, %c0_22], %62 {strides = array<i32>} : memref<2x1xf32, #tpu.memory_space<vmem>>, vector<2x1xf32>,
    return
  }
  func.func @transform_0(%arg0: i32) -> (i32, i32) {
    %c0_i32 = arith.constant 0 : i32
    %c0_i32_0 = arith.constant 0 : i32
    return %arg0, %c0_i32 : i32, i32
  }
  func.func @transform_1(%arg0: i32) -> (i32, i32) {
    %c0_i32 = arith.constant 0 : i32
    %c0_i32_0 = arith.constant 0 : i32
    %c0_i32_1 = arith.constant 0 : i32
    return %c0_i32, %c0_i32_0 : i32, i32
  }
  func.func @transform_2(%arg0: i32) -> (i32, i32) {
    %c0_i32 = arith.constant 0 : i32
    %c0_i32_0 = arith.constant 0 : i32
    return %arg0, %c0_i32 : i32, i32
  }
}

</mosaic_0001>

<llo_original>
// kernel: tpu_custom_call.1
$region0: #{tpu_custom_call.1}
  #allocation0 [shape = 'u32[]', space=smem, size = 0x4, offset = 0x4, fixed_abs, tag = 'smem constant byte address 0x4 - core index']
  #allocation1 [shape = 'u32[144,128]{1,0:T(1,128)}', space=vmem, size = 0x12000, scoped, tag = 'internal scratch']
  %s0 = inlined_call_operand.hbm [shape: f32[2,16], index: 0, kind: input, shape index: {}]
  %s1 = inlined_call_operand.hbm [shape: f32[128,128], index: 1, kind: input, shape index: {}]
  %s2 = inlined_call_operand.vmem [shape: f32[2,1], index: 2, kind: output, shape index: {}]
  %s3 = sld [smem:[#allocation0]]
  $region26: #{tpu_custom_call.1} parent=0
    _
  %s5 = ssub.s32 1, %s3
  %s6 = scalar_select 0, %s5, %s3
  $region1: #{tpu_custom_call.1} parent=0
    #allocation2 [shape = 'u8[1024]{0}', space=vmem, size = 0x400, scoped, tag = 'input window, operand 0, single buffered']
    #allocation3 [shape = 's32[1]{0}', space=sflag, size = 0x4, scoped, tag = 'scoped memory for tpu_custom_call.1']
    #allocation4 [shape = 'u8[65536]{0}', space=vmem, size = 0x10000, scoped, tag = 'input window, operand 1, single buffered']
    #allocation5 [shape = 's32[1]{0}', space=sflag, size = 0x4, scoped, tag = 'scoped memory for tpu_custom_call.1']
    %7 = vsyncpa [#allocation3], 0
    %8 = vsyncpa [#allocation5], 0
    // Predicated region
    $region2: #{tpu_custom_call.1} parent=1 // pred_check
      _
    $region3: #{tpu_custom_call.1} parent=1 // pred_check_branch
      %10 = sbr.rel (0) target = $region5
    $region4: #{tpu_custom_call.1} parent=1 // pred_region
      %s12 = ssub.s32 32, 32
      %13 = vsyncadd [#allocation3], %s12
      %s15 = sshll.u32 [#allocation2], 4
      %s16 = int_to_ptr.vmem [resolvable:$true] %s15
      %18 = dma.hbm_to_vmem [thread:$0]  %s0, 32, %s16, [#allocation3]
    $region5: #{tpu_custom_call.1} parent=1 // pred_fallthru
      _
    // Predicated region
    $region6: #{tpu_custom_call.1} parent=1 // pred_check
      _
    $region7: #{tpu_custom_call.1} parent=1 // pred_check_branch
      %20 = sbr.rel (0) target = $region9
    $region8: #{tpu_custom_call.1} parent=1 // pred_region
      %s22 = ssub.s32 2048, 2048
      %23 = vsyncadd [#allocation5], %s22
      %s24 = sshll.u32 [#allocation4], 4
      %s25 = int_to_ptr.vmem [resolvable:$true] %s24
      %30 = dma.hbm_to_vmem [thread:$0]  %s1, 2048, %s25, [#allocation5], 128, 128, 8
    $region9: #{tpu_custom_call.1} parent=1 // pred_fallthru
      _
    // Predicated region
    $region10: #{tpu_custom_call.1} parent=1 // pred_check
      _
    $region11: #{tpu_custom_call.1} parent=1 // pred_check_branch
      %32 = sbr.rel (0) target = $region13
    $region12: #{tpu_custom_call.1} parent=1 // pred_region
      %33 = dma.done [#allocation3], 32
    $region13: #{tpu_custom_call.1} parent=1 // pred_fallthru
      _
    // Predicated region
    $region14: #{tpu_custom_call.1} parent=1 // pred_check
      _
    $region15: #{tpu_custom_call.1} parent=1 // pred_check_branch
      %35 = sbr.rel (0) target = $region17
    $region16: #{tpu_custom_call.1} parent=1 // pred_region
      %36 = dma.done [#allocation5], 2048
    $region17: #{tpu_custom_call.1} parent=1 // pred_fallthru
      _
    %v37 = vld [vmem:[#allocation2] sm:$0x3]
    %v38 = vld [vmem:[#allocation4] sm:$0xff]
    %v39 = vld [vmem:[#allocation4 + $0x8] sm:$0xff]
    %v40 = vld [vmem:[#allocation4 + $0x10] sm:$0x1]
    %v41 = vld [vmem:[#allocation4 + $0x20] sm:$0xff]
    %v42 = vld [vmem:[#allocation4 + $0x28] sm:$0x1]
    %v43 = vld [vmem:[#allocation4 + $0x18] sm:$0x1]
    %v44 = vld [vmem:[#allocation4 + $0x30] sm:$0xf]
    %v45 = vld [vmem:[#allocation4 + $0x38] sm:$0xff]
    %v46 = vld [vmem:[#allocation4 + $0x40] sm:$0xff]
    %v47 = vld [vmem:[#allocation4 + $0x48] sm:$0xff]
    %v48 = vld [vmem:[#allocation4 + $0x50] sm:$0xff]
    %v49 = vld [vmem:[#allocation4 + $0x58] sm:$0x1]
    %v50 = vld [vmem:[#allocation4 + $0x60] sm:$0x1]
    %v51 = vld [vmem:[#allocation4 + $0x68] sm:$0x1]
    %v52 = vlaneseq
    %v53 = vshrl.u32 %v52, 7
    %v54 = vsub.s32 0, %v53
    %v55 = vrot.slane %v40, %v54
    %vm56 = vcmask 130048
    %v58 = vsel %vm56, %v37, 0
    %60 = vmatprep.subr.mxu0 0.0
    %61 = vmatpush1.msra.mxu0 0.0
    %62 = vmatprep.subr.mxu0 0.0
    %63 = vmatpush1.msra.mxu0 0.0
    %64 = vmatprep.subr.mxu0 0.0
    %65 = vmatpush1.msra.mxu0 0.0
    %66 = vmatprep.subr.mxu0 0.0
    %67 = vmatpush1.msra.mxu0 0.0
    %68 = vmatprep.subr.mxu0 0.0
    %69 = vmatpush1.msra.mxu0 0.0
    %70 = vmatprep.subr.mxu0 0.0
    %71 = vmatpush1.msra.mxu0 0.0
    %72 = vmatprep.subr.mxu0 0.0
    %73 = vmatpush1.msra.mxu0 0.0
    %74 = vmatprep.subr.mxu0 0.0
    %75 = vmatpush1.msra.mxu0 0.0
    %76 = vmatprep.subr.mxu0 0.0
    %77 = vmatpush1.msra.mxu0 0.0
    %78 = vmatprep.subr.mxu0 0.0
    %79 = vmatpush1.msra.mxu0 0.0
    %80 = vmatprep.subr.mxu0 0.0
    %81 = vmatpush1.msra.mxu0 0.0
    %82 = vmatprep.subr.mxu0 0.0
    %83 = vmatpush1.msra.mxu0 0.0
    %84 = vmatprep.subr.mxu0 0.0
    %85 = vmatpush1.msra.mxu0 0.0
    %86 = vmatprep.subr.mxu0 0.0
    %87 = vmatpush1.msra.mxu0 0.0
    %88 = vmatprep.subr.mxu0 0.0
    %89 = vmatpush1.msra.mxu0 %v39
    %90 = vmatprep.subr.mxu0 0.0
    %91 = vmatpush1.msra.mxu0 %v38
    %92 = vmatprep.subr.mxu0 0.0
    %93 = vmatpush2.msra.mxu0 0.0
    %94 = vmatprep.subr.mxu0 0.0
    %95 = vmatpush2.msra.mxu0 0.0
    %96 = vmatprep.subr.mxu0 0.0
    %97 = vmatpush2.msra.mxu0 0.0
    %98 = vmatprep.subr.mxu0 0.0
    %99 = vmatpush2.msra.mxu0 0.0
    %100 = vmatprep.subr.mxu0 0.0
    %101 = vmatpush2.msra.mxu0 0.0
    %102 = vmatprep.subr.mxu0 0.0
    %103 = vmatpush2.msra.mxu0 0.0
    %104 = vmatprep.subr.mxu0 0.0
    %105 = vmatpush2.msra.mxu0 0.0
    %106 = vmatprep.subr.mxu0 0.0
    %107 = vmatpush2.msra.mxu0 0.0
    %108 = vmatprep.subr.mxu0 0.0
    %109 = vmatpush2.msra.mxu0 0.0
    %110 = vmatprep.subr.mxu0 0.0
    %111 = vmatpush2.msra.mxu0 0.0
    %112 = vmatprep.subr.mxu0 0.0
    %113 = vmatpush2.msra.mxu0 0.0
    %114 = vmatprep.subr.mxu0 0.0
    %115 = vmatpush2.msra.mxu0 0.0
    %116 = vmatprep.subr.mxu0 0.0
    %117 = vmatpush2.msra.mxu0 0.0
    %118 = vmatprep.subr.mxu0 0.0
    %119 = vmatpush2.msra.mxu0 0.0
    %120 = vmatprep.subr.mxu0 0.0
    %121 = vmatpush2.msra.mxu0 0.0
    %122 = vmatprep.subr.mxu0 0.0
    %123 = vmatpush2.msra.mxu0 0.0
    %124 = vmatprep.mubr.f32.mxu0 0.0
    %125 = vmatmul.mubr.f32.gmra.mxu0 %v58
    %v126 = vpop.f32.mrf.mxu0
    %v127 = vadd.f32 %v55, %v126
    %v128 = vpop.f32.mrf.mxu0
    %129 = vdwg.mxu0
    %v130 = vmax.f32 %v127, 0.0
    %132 = vrot.lane.b32.xlu0 %v130, 92
    %v133 = vpop.permute.xlu0 %132
    %v135 = vmax.f32 %v130, %v133
    %137 = vrot.lane.b32.xlu0 %v135, 110
    %v138 = vpop.permute.xlu0 %137
    %v140 = vmax.f32 %v135, %v138
    %142 = vrot.lane.b32.xlu0 %v140, 119
    %v143 = vpop.permute.xlu0 %142
    %v145 = vmax.f32 %v140, %v143
    %147 = vrot.lane.b32.xlu0 %v145, 119
    %v148 = vpop.permute.xlu0 %147
    %v150 = vmax.f32 %v145, %v148
    %v151 = vlaneseq
    %v152 = vshrl.u32 %v151, 7
    %v153 = vsub.s32 0, %v152
    %v154 = vrot.slane %v43, %v153
    %vm155 = vcmask 72704
    %v157 = vsel %vm155, %v150, 0
    %vm159 = vcmask 1040384
    %v161 = vsel %vm159, %v42, 0
    %163 = vmatprep.subr.mxu0 0.0
    %164 = vmatpush1.msra.mxu0 0.0
    %165 = vmatprep.subr.mxu0 0.0
    %166 = vmatpush1.msra.mxu0 0.0
    %167 = vmatprep.subr.mxu0 0.0
    %168 = vmatpush1.msra.mxu0 0.0
    %169 = vmatprep.subr.mxu0 0.0
    %170 = vmatpush1.msra.mxu0 0.0
    %171 = vmatprep.subr.mxu0 0.0
    %172 = vmatpush1.msra.mxu0 0.0
    %173 = vmatprep.subr.mxu0 0.0
    %174 = vmatpush1.msra.mxu0 0.0
    %175 = vmatprep.subr.mxu0 0.0
    %176 = vmatpush1.msra.mxu0 0.0
    %177 = vmatprep.subr.mxu0 0.0
    %178 = vmatpush1.msra.mxu0 0.0
    %179 = vmatprep.subr.mxu0 0.0
    %180 = vmatpush1.msra.mxu0 0.0
    %181 = vmatprep.subr.mxu0 0.0
    %182 = vmatpush1.msra.mxu0 0.0
    %183 = vmatprep.subr.mxu0 0.0
    %184 = vmatpush1.msra.mxu0 0.0
    %185 = vmatprep.subr.mxu0 0.0
    %186 = vmatpush1.msra.mxu0 0.0
    %187 = vmatprep.subr.mxu0 0.0
    %188 = vmatpush1.msra.mxu0 0.0
    %189 = vmatprep.subr.mxu0 0.0
    %190 = vmatpush1.msra.mxu0 0.0
    %191 = vmatprep.subr.mxu0 0.0
    %192 = vmatpush1.msra.mxu0 %v161
    %193 = vmatprep.subr.mxu0 0.0
    %194 = vmatpush1.msra.mxu0 %v41
    %195 = vmatprep.subr.mxu0 0.0
    %196 = vmatpush2.msra.mxu0 0.0
    %197 = vmatprep.subr.mxu0 0.0
    %198 = vmatpush2.msra.mxu0 0.0
    %199 = vmatprep.subr.mxu0 0.0
    %200 = vmatpush2.msra.mxu0 0.0
    %201 = vmatprep.subr.mxu0 0.0
    %202 = vmatpush2.msra.mxu0 0.0
    %203 = vmatprep.subr.mxu0 0.0
    %204 = vmatpush2.msra.mxu0 0.0
    %205 = vmatprep.subr.mxu0 0.0
    %206 = vmatpush2.msra.mxu0 0.0
    %207 = vmatprep.subr.mxu0 0.0
    %208 = vmatpush2.msra.mxu0 0.0
    %209 = vmatprep.subr.mxu0 0.0
    %210 = vmatpush2.msra.mxu0 0.0
    %211 = vmatprep.subr.mxu0 0.0
    %212 = vmatpush2.msra.mxu0 0.0
    %213 = vmatprep.subr.mxu0 0.0
    %214 = vmatpush2.msra.mxu0 0.0
    %215 = vmatprep.subr.mxu0 0.0
    %216 = vmatpush2.msra.mxu0 0.0
    %217 = vmatprep.subr.mxu0 0.0
    %218 = vmatpush2.msra.mxu0 0.0
    %219 = vmatprep.subr.mxu0 0.0
    %220 = vmatpush2.msra.mxu0 0.0
    %221 = vmatprep.subr.mxu0 0.0
    %222 = vmatpush2.msra.mxu0 0.0
    %223 = vmatprep.subr.mxu0 0.0
    %224 = vmatpush2.msra.mxu0 0.0
    %225 = vmatprep.subr.mxu0 0.0
    %226 = vmatpush2.msra.mxu0 0.0
    %227 = vmatprep.mubr.f32.mxu0 0.0
    %228 = vmatmul.mubr.f32.gmra.mxu0 %v157
    %v229 = vpop.f32.mrf.mxu0
    %v230 = vadd.f32 %v154, %v229
    %v231 = vpop.f32.mrf.mxu0
    %232 = vdwg.mxu0
    %v233 = vmax.f32 %v230, 0.0
    %235 = vrot.lane.b32.xlu0 %v233, 112
    %v236 = vpop.permute.xlu0 %235
    %v238 = vmax.f32 %v233, %v236
    %240 = vrot.lane.b32.xlu0 %v238, 120
    %v241 = vpop.permute.xlu0 %240
    %v243 = vmax.f32 %v238, %v241
    %245 = vrot.lane.b32.xlu0 %v243, 124
    %v246 = vpop.permute.xlu0 %245
    %v248 = vmax.f32 %v243, %v246
    %250 = vrot.lane.b32.xlu0 %v248, 124
    %v251 = vpop.permute.xlu0 %250
    %v253 = vmax.f32 %v248, %v251
    %v254 = vlaneseq
    %v255 = vshrl.u32 %v254, 7
    %v256 = vsub.s32 0, %v255
    %v257 = vrot.slane %v49, %v256
    %vm258 = vcmask 31744
    %v260 = vsel %vm258, %v253, 0
    %vm262 = vcmask 1043456
    %v264 = vsel %vm262, %v44, 0
    %266 = vmatprep.subr.mxu0 0.0
    %267 = vmatpush1.msra.mxu0 0.0
    %268 = vmatprep.subr.mxu0 0.0
    %269 = vmatpush1.msra.mxu0 0.0
    %270 = vmatprep.subr.mxu0 0.0
    %271 = vmatpush1.msra.mxu0 0.0
    %272 = vmatprep.subr.mxu0 0.0
    %273 = vmatpush1.msra.mxu0 0.0
    %274 = vmatprep.subr.mxu0 0.0
    %275 = vmatpush1.msra.mxu0 0.0
    %276 = vmatprep.subr.mxu0 0.0
    %277 = vmatpush1.msra.mxu0 0.0
    %278 = vmatprep.subr.mxu0 0.0
    %279 = vmatpush1.msra.mxu0 0.0
    %280 = vmatprep.subr.mxu0 0.0
    %281 = vmatpush1.msra.mxu0 0.0
    %282 = vmatprep.subr.mxu0 0.0
    %283 = vmatpush1.msra.mxu0 0.0
    %284 = vmatprep.subr.mxu0 0.0
    %285 = vmatpush1.msra.mxu0 0.0
    %286 = vmatprep.subr.mxu0 0.0
    %287 = vmatpush1.msra.mxu0 0.0
    %288 = vmatprep.subr.mxu0 0.0
    %289 = vmatpush1.msra.mxu0 0.0
    %290 = vmatprep.subr.mxu0 0.0
    %291 = vmatpush1.msra.mxu0 0.0
    %292 = vmatprep.subr.mxu0 0.0
    %293 = vmatpush1.msra.mxu0 0.0
    %294 = vmatprep.subr.mxu0 0.0
    %295 = vmatpush1.msra.mxu0 0.0
    %296 = vmatprep.subr.mxu0 0.0
    %297 = vmatpush1.msra.mxu0 %v264
    %298 = vmatprep.subr.mxu0 0.0
    %299 = vmatpush2.msra.mxu0 0.0
    %300 = vmatprep.subr.mxu0 0.0
    %301 = vmatpush2.msra.mxu0 0.0
    %302 = vmatprep.subr.mxu0 0.0
    %303 = vmatpush2.msra.mxu0 0.0
    %304 = vmatprep.subr.mxu0 0.0
    %305 = vmatpush2.msra.mxu0 0.0
    %306 = vmatprep.subr.mxu0 0.0
    %307 = vmatpush2.msra.mxu0 0.0
    %308 = vmatprep.subr.mxu0 0.0
    %309 = vmatpush2.msra.mxu0 0.0
    %310 = vmatprep.subr.mxu0 0.0
    %311 = vmatpush2.msra.mxu0 0.0
    %312 = vmatprep.subr.mxu0 0.0
    %313 = vmatpush2.msra.mxu0 0.0
    %314 = vmatprep.subr.mxu0 0.0
    %315 = vmatpush2.msra.mxu0 0.0
    %316 = vmatprep.subr.mxu0 0.0
    %317 = vmatpush2.msra.mxu0 0.0
    %318 = vmatprep.subr.mxu0 0.0
    %319 = vmatpush2.msra.mxu0 0.0
    %320 = vmatprep.subr.mxu0 0.0
    %321 = vmatpush2.msra.mxu0 0.0
    %322 = vmatprep.subr.mxu0 0.0
    %323 = vmatpush2.msra.mxu0 0.0
    %324 = vmatprep.subr.mxu0 0.0
    %325 = vmatpush2.msra.mxu0 0.0
    %326 = vmatprep.subr.mxu0 0.0
    %327 = vmatpush2.msra.mxu0 0.0
    %328 = vmatprep.subr.mxu0 0.0
    %329 = vmatpush2.msra.mxu0 0.0
    %330 = vmatprep.mubr.f32.mxu0 0.0
    %331 = vmatmul.mubr.f32.gmra.mxu0 %v260
    %v332 = vpop.f32.mrf.mxu0
    %v333 = vadd.f32 %v257, %v332
    %v334 = vpop.f32.mrf.mxu0
    %335 = vdwg.mxu0
    %v336 = vmax.f32 %v333, 0.0
    %v337 = vlaneseq
    %v338 = vshrl.u32 %v337, 7
    %v339 = vsub.s32 0, %v338
    %v340 = vrot.slane %v50, %v339
    %v342 = vsel %vm56, %v336, 0
    %344 = vmatprep.subr.mxu0 0.0
    %345 = vmatpush1.msra.mxu0 0.0
    %346 = vmatprep.subr.mxu0 0.0
    %347 = vmatpush1.msra.mxu0 0.0
    %348 = vmatprep.subr.mxu0 0.0
    %349 = vmatpush1.msra.mxu0 0.0
    %350 = vmatprep.subr.mxu0 0.0
    %351 = vmatpush1.msra.mxu0 0.0
    %352 = vmatprep.subr.mxu0 0.0
    %353 = vmatpush1.msra.mxu0 0.0
    %354 = vmatprep.subr.mxu0 0.0
    %355 = vmatpush1.msra.mxu0 0.0
    %356 = vmatprep.subr.mxu0 0.0
    %357 = vmatpush1.msra.mxu0 0.0
    %358 = vmatprep.subr.mxu0 0.0
    %359 = vmatpush1.msra.mxu0 0.0
    %360 = vmatprep.subr.mxu0 0.0
    %361 = vmatpush1.msra.mxu0 0.0
    %362 = vmatprep.subr.mxu0 0.0
    %363 = vmatpush1.msra.mxu0 0.0
    %364 = vmatprep.subr.mxu0 0.0
    %365 = vmatpush1.msra.mxu0 0.0
    %366 = vmatprep.subr.mxu0 0.0
    %367 = vmatpush1.msra.mxu0 0.0
    %368 = vmatprep.subr.mxu0 0.0
    %369 = vmatpush1.msra.mxu0 0.0
    %370 = vmatprep.subr.mxu0 0.0
    %371 = vmatpush1.msra.mxu0 0.0
    %372 = vmatprep.subr.mxu0 0.0
    %373 = vmatpush1.msra.mxu0 %v46
    %374 = vmatprep.subr.mxu0 0.0
    %375 = vmatpush1.msra.mxu0 %v45
    %376 = vmatprep.subr.mxu0 0.0
    %377 = vmatpush2.msra.mxu0 0.0
    %378 = vmatprep.subr.mxu0 0.0
    %379 = vmatpush2.msra.mxu0 0.0
    %380 = vmatprep.subr.mxu0 0.0
    %381 = vmatpush2.msra.mxu0 0.0
    %382 = vmatprep.subr.mxu0 0.0
    %383 = vmatpush2.msra.mxu0 0.0
    %384 = vmatprep.subr.mxu0 0.0
    %385 = vmatpush2.msra.mxu0 0.0
    %386 = vmatprep.subr.mxu0 0.0
    %387 = vmatpush2.msra.mxu0 0.0
    %388 = vmatprep.subr.mxu0 0.0
    %389 = vmatpush2.msra.mxu0 0.0
    %390 = vmatprep.subr.mxu0 0.0
    %391 = vmatpush2.msra.mxu0 0.0
    %392 = vmatprep.subr.mxu0 0.0
    %393 = vmatpush2.msra.mxu0 0.0
    %394 = vmatprep.subr.mxu0 0.0
    %395 = vmatpush2.msra.mxu0 0.0
    %396 = vmatprep.subr.mxu0 0.0
    %397 = vmatpush2.msra.mxu0 0.0
    %398 = vmatprep.subr.mxu0 0.0
    %399 = vmatpush2.msra.mxu0 0.0
    %400 = vmatprep.subr.mxu0 0.0
    %401 = vmatpush2.msra.mxu0 0.0
    %402 = vmatprep.subr.mxu0 0.0
    %403 = vmatpush2.msra.mxu0 0.0
    %404 = vmatprep.subr.mxu0 0.0
    %405 = vmatpush2.msra.mxu0 0.0
    %406 = vmatprep.subr.mxu0 0.0
    %407 = vmatpush2.msra.mxu0 0.0
    %408 = vmatprep.mubr.f32.mxu0 0.0
    %409 = vmatmul.mubr.f32.gmra.mxu0 %v342
    %v410 = vpop.f32.mrf.mxu0
    %v411 = vadd.f32 %v340, %v410
    %v412 = vpop.f32.mrf.mxu0
    %413 = vdwg.mxu0
    %v414 = vmax.f32 %v411, 0.0
    %v415 = vlaneseq
    %v416 = vshrl.u32 %v415, 7
    %v417 = vsub.s32 0, %v416
    %v418 = vrot.slane %v51, %v417
    %v420 = vsel %vm56, %v414, 0
    %422 = vmatprep.subr.mxu0 0.0
    %423 = vmatpush1.msra.mxu0 0.0
    %424 = vmatprep.subr.mxu0 0.0
    %425 = vmatpush1.msra.mxu0 0.0
    %426 = vmatprep.subr.mxu0 0.0
    %427 = vmatpush1.msra.mxu0 0.0
    %428 = vmatprep.subr.mxu0 0.0
    %429 = vmatpush1.msra.mxu0 0.0
    %430 = vmatprep.subr.mxu0 0.0
    %431 = vmatpush1.msra.mxu0 0.0
    %432 = vmatprep.subr.mxu0 0.0
    %433 = vmatpush1.msra.mxu0 0.0
    %434 = vmatprep.subr.mxu0 0.0
    %435 = vmatpush1.msra.mxu0 0.0
    %436 = vmatprep.subr.mxu0 0.0
    %437 = vmatpush1.msra.mxu0 0.0
    %438 = vmatprep.subr.mxu0 0.0
    %439 = vmatpush1.msra.mxu0 0.0
    %440 = vmatprep.subr.mxu0 0.0
    %441 = vmatpush1.msra.mxu0 0.0
    %442 = vmatprep.subr.mxu0 0.0
    %443 = vmatpush1.msra.mxu0 0.0
    %444 = vmatprep.subr.mxu0 0.0
    %445 = vmatpush1.msra.mxu0 0.0
    %446 = vmatprep.subr.mxu0 0.0
    %447 = vmatpush1.msra.mxu0 0.0
    %448 = vmatprep.subr.mxu0 0.0
    %449 = vmatpush1.msra.mxu0 0.0
    %450 = vmatprep.subr.mxu0 0.0
    %451 = vmatpush1.msra.mxu0 %v48
    %452 = vmatprep.subr.mxu0 0.0
    %453 = vmatpush1.msra.mxu0 %v47
    %454 = vmatprep.subr.mxu0 0.0
    %455 = vmatpush2.msra.mxu0 0.0
    %456 = vmatprep.subr.mxu0 0.0
    %457 = vmatpush2.msra.mxu0 0.0
    %458 = vmatprep.subr.mxu0 0.0
    %459 = vmatpush2.msra.mxu0 0.0
    %460 = vmatprep.subr.mxu0 0.0
    %461 = vmatpush2.msra.mxu0 0.0
    %462 = vmatprep.subr.mxu0 0.0
    %463 = vmatpush2.msra.mxu0 0.0
    %464 = vmatprep.subr.mxu0 0.0
    %465 = vmatpush2.msra.mxu0 0.0
    %466 = vmatprep.subr.mxu0 0.0
    %467 = vmatpush2.msra.mxu0 0.0
    %468 = vmatprep.subr.mxu0 0.0
    %469 = vmatpush2.msra.mxu0 0.0
    %470 = vmatprep.subr.mxu0 0.0
    %471 = vmatpush2.msra.mxu0 0.0
    %472 = vmatprep.subr.mxu0 0.0
    %473 = vmatpush2.msra.mxu0 0.0
    %474 = vmatprep.subr.mxu0 0.0
    %475 = vmatpush2.msra.mxu0 0.0
    %476 = vmatprep.subr.mxu0 0.0
    %477 = vmatpush2.msra.mxu0 0.0
    %478 = vmatprep.subr.mxu0 0.0
    %479 = vmatpush2.msra.mxu0 0.0
    %480 = vmatprep.subr.mxu0 0.0
    %481 = vmatpush2.msra.mxu0 0.0
    %482 = vmatprep.subr.mxu0 0.0
    %483 = vmatpush2.msra.mxu0 0.0
    %484 = vmatprep.subr.mxu0 0.0
    %485 = vmatpush2.msra.mxu0 0.0
    %486 = vmatprep.mubr.f32.mxu0 0.0
    %487 = vmatmul.mubr.f32.gmra.mxu0 %v420
    %v488 = vpop.f32.mrf.mxu0
    %v489 = vadd.f32 %v418, %v488
    %v490 = vpop.f32.mrf.mxu0
    %491 = vdwg.mxu0
    %v492 = vxor.u32 %v489, 2147483648
    %v493 = vmul.f32 %v492, 1.442695
    %v494 = vpow.pop %v493
    %v495 = vadd.f32 %v494, 1.0
    %v496 = vrcp.pop %v495
    %v497 = vmul.f32 1.0, %v496
    %vm498 = vcmask 1024
    %499 = vst.msk [vmem:[%s2] sm:$0x3] %vm498, %v497
    // Predicated region
    $region18: #{tpu_custom_call.1} parent=1 // pred_check
      _
    $region19: #{tpu_custom_call.1} parent=1 // pred_check_branch
      %501 = sbr.rel (0) target = $region21
    $region20: #{tpu_custom_call.1} parent=1 // pred_region
      _
    $region21: #{tpu_custom_call.1} parent=1 // pred_fallthru
      _
    // Predicated region
    $region22: #{tpu_custom_call.1} parent=1 // pred_check
      _
    $region23: #{tpu_custom_call.1} parent=1 // pred_check_branch
      %503 = sbr.rel (0) target = $region25
    $region24: #{tpu_custom_call.1} parent=1 // pred_region
      _
    $region25: #{tpu_custom_call.1} parent=1 // pred_fallthru
      _
    %504 = vsyncpa [#allocation3], 1
    %505 = vsyncpa [#allocation5], 1

</llo_original>
